<compile_context>
chip_gen: v5e
topology: v5e:2x2
jax: 0.10.0
libtpu: 0.0.40
codegen_flags: <defaults>
</compile_context>

<pallas_src>
import functools

import jax
import jax.numpy as jnp
from jax import lax
from jax.experimental import pallas as pl
from jax.experimental.pallas import tpu as pltpu

LAYER_NORM_EPS = 1e-5            # LayoutLMv3 config default
_INV_SQRT2 = 0.7071067811865476  # 1/sqrt(2) for exact-erf GELU


def _round_up(x, m):
    return ((x + m - 1) // m) * m


def _vmem_estimate(tm, tn, H, x_isz, out_isz, c_isz):
    """Rough VMEM footprint (bytes): double-buffered pipelined operands,
    the h scratch, and an allowance for f32 GELU/LayerNorm temporaries."""
    return int(
        2 * tm * H * x_isz          # x row tile (double-buffered)
        + 2 * H * H * c_isz         # dense weight
        + 6 * H * 4                 # dense bias / LN gamma / LN beta (f32)
        + 2 * H * tn * c_isz        # decoder weight tile
        + 2 * tn * 4                # decoder bias tile
        + 2 * tm * tn * out_isz     # output tile (double-buffered)
        + tm * H * c_isz            # h scratch (single copy)
        + 4 * tm * H * 4            # f32 temporaries for GELU / LayerNorm
    )


def _pick_tiles(M, C_pad, H, tm_req, tn_req, x_isz, out_isz, c_isz, budget):
    """Pick (tm, tn). Prefer a decoder-weight-resident layout (tn == C_pad),
    otherwise fall back to 128-aligned column tiles, shrinking to fit VMEM."""
    tm0 = min(tm_req, _round_up(M, 8))

    # 1) decoder-weight resident: single column tile, w2 DMA'd exactly once.
    tm = tm0
    while True:
        if _vmem_estimate(tm, C_pad, H, x_isz, out_isz, c_isz) <= budget:
            return tm, C_pad
        if tm <= 256:
            break
        tm = max(8, _round_up(tm // 2, 8))

    # 2) column-tiled fallback (large codebooks / small VMEM).
    tm, tn = tm0, min(tn_req, C_pad)
    while _vmem_estimate(tm, tn, H, x_isz, out_isz, c_isz) > budget:
        if tm >= tn and tm > 8:
            tm = max(8, _round_up(tm // 2, 8))
        elif tn > 128:
            tn = max(128, _round_up(tn // 2, 128))
        elif tm > 8:
            tm = max(8, _round_up(tm // 2, 8))
        else:
            break
    return tm, tn


def _mim_head_kernel(x_ref, w1_ref, b1_ref, gamma_ref, beta_ref,
                     w2_ref, b2_ref, o_ref, h_ref, *, eps):
    j = pl.program_id(1)

    # Dense + GELU + LayerNorm once per row tile (j == 0); the normalized
    # activations are stashed in VMEM and reused for every decoder tile j.
    @pl.when(j == 0)
    def _():
        # In-kernel bf16 cast of x (VPU cast, hidden under the MXU).
        xc = x_ref[...].astype(w1_ref.dtype)
        # dense: [tm, H] @ [H, H], bf16 operands, f32 accumulation
        h = jnp.dot(xc, w1_ref[...],
                    preferred_element_type=jnp.float32) + b1_ref[...]

        # exact (erf) GELU in f32, matching torch.nn.functional.gelu default
        h = 0.5 * h * (1.0 + lax.erf(h * _INV_SQRT2))

        # LayerNorm over the hidden axis, two-pass (centered) variance
        mean = jnp.mean(h, axis=-1, keepdims=True)
        var = jnp.mean(jnp.square(h - mean), axis=-1, keepdims=True)
        h = (h - mean) * lax.rsqrt(var + eps)
        h = h * gamma_ref[...] + beta_ref[...]

        h_ref[...] = h.astype(h_ref.dtype)

    # decoder: [tm, H] @ [H, tn], bf16 operands, f32 accumulation
    logits = jnp.dot(h_ref[...], w2_ref[...],
                     preferred_element_type=jnp.float32) + b2_ref[...]
    o_ref[...] = logits.astype(o_ref.dtype)


def mim_head(x, w1, b1, gamma, beta, w2, b_dec, *, tm=1024, tn=2048,
             compute_dtype=jnp.bfloat16, out_dtype=None, eps=LAYER_NORM_EPS):
    """x: [B, S, H] -> logits [B, S, C].

    w1:[H,H] (dense.weight.T), b1:[H], gamma/beta:[H] (LayerNorm),
    w2:[H,C] (decoder.weight.T), b_dec:[C].
    out_dtype defaults to x.dtype (PyTorch-like f32 logits); pass
    jnp.bfloat16 to halve logits write-back bandwidth if downstream allows.
    """
    B, S, H = x.shape
    C = w2.shape[1]
    M = B * S
    out_dtype = x.dtype if out_dtype is None else out_dtype

    # Pad the codebook axis to a lane-dense multiple of 128.
    C_pad = _round_up(C, 128)

    x_isz = jnp.dtype(x.dtype).itemsize
    out_isz = jnp.dtype(out_dtype).itemsize
    c_isz = jnp.dtype(compute_dtype).itemsize

    # VMEM budget per generation (v7x: 64 MiB, v5e/v6e: 128 MiB).
    try:
        vmem_cap = int(pltpu.get_tpu_info().vmem_capacity_bytes)
    except Exception:
        vmem_cap = 64 * 1024 * 1024   # safe lower bound across generations
    budget = int(vmem_cap * 0.75)

    tm_eff, tn_eff = _pick_tiles(M, C_pad, H, tm, tn,
                                 x_isz, out_isz, c_isz, budget)
    M_pad = _round_up(M, tm_eff)
    C_pad = _round_up(C_pad, tn_eff)
    resident = (tn_eff == C_pad)   # decoder weight DMA'd once

    # x stays in its original dtype; the bf16 cast happens inside the kernel.
    x2 = x.reshape(M, H)
    if M_pad != M:
        x2 = jnp.pad(x2, ((0, M_pad - M), (0, 0)))

    # NOTE: in production, pre-convert weights to compute_dtype once at load
    # time instead of per call.
    w1_c = w1.astype(compute_dtype)
    w2_c = w2.astype(compute_dtype)
    b_dec_2 = b_dec.reshape(1, C).astype(jnp.float32)
    if C_pad != C:
        w2_c = jnp.pad(w2_c, ((0, 0), (0, C_pad - C)))
        b_dec_2 = jnp.pad(b_dec_2, ((0, 0), (0, C_pad - C)))

    b1_2 = b1.reshape(1, H).astype(jnp.float32)
    gamma_2 = gamma.reshape(1, H).astype(jnp.float32)
    beta_2 = beta.reshape(1, H).astype(jnp.float32)

    n_i = M_pad // tm_eff
    n_j = C_pad // tn_eff
    grid = (n_i, n_j)

    w2_streams = 1 if resident else n_i
    cost = pl.CostEstimate(
        flops=2 * M_pad * H * H + 2 * M_pad * H * C_pad,
        transcendentals=M_pad * H,
        bytes_accessed=(M_pad * H * x_isz
                        + H * H * c_isz
                        + w2_streams * H * C_pad * c_isz
                        + M_pad * C_pad * out_isz),
    )

    est = _vmem_estimate(tm_eff, tn_eff, H, x_isz, out_isz, c_isz)
    vmem_limit = max(32 * 1024 * 1024, est + 8 * 1024 * 1024)
    vmem_limit = int(min(vmem_limit, vmem_cap))

    kernel = functools.partial(_mim_head_kernel, eps=eps)

    # TODO(synk): optional further win on v6e/v7x — double-buffer the h scratch
    # and compute the next row tile's dense+GELU+LN under the last j step to
    # hide the prologue; omitted here (only matters on the column-tiled path).
    out = pl.pallas_call(
        kernel,
        out_shape=jax.ShapeDtypeStruct((M_pad, C_pad), out_dtype),
        grid_spec=pltpu.PrefetchScalarGridSpec(
            num_scalar_prefetch=0,
            grid=grid,
            in_specs=[
                pl.BlockSpec((tm_eff, H), lambda i, j: (i, 0)),   # x rows
                pl.BlockSpec((H, H), lambda i, j: (0, 0)),        # dense weight
                pl.BlockSpec((1, H), lambda i, j: (0, 0)),        # dense bias
                pl.BlockSpec((1, H), lambda i, j: (0, 0)),        # LN gamma
                pl.BlockSpec((1, H), lambda i, j: (0, 0)),        # LN beta
                pl.BlockSpec((H, tn_eff), lambda i, j: (0, j)),   # decoder W tile
                pl.BlockSpec((1, tn_eff), lambda i, j: (0, j)),   # decoder bias
            ],
            out_specs=pl.BlockSpec((tm_eff, tn_eff), lambda i, j: (i, j)),
            scratch_shapes=[pltpu.VMEM((tm_eff, H), compute_dtype)],
        ),
        compiler_params=pltpu.CompilerParams(
            dimension_semantics=("parallel", "arbitrary"),
            vmem_limit_bytes=vmem_limit,
        ),
        cost_estimate=cost,
    )(x2, w1_c, b1_2, gamma_2, beta_2, w2_c, b_dec_2)

    out = out[:M, :C]
    return out.reshape(B, S, C)


def mim_head_reference(x, w1, b1, gamma, beta, w2, b_dec,
                       compute_dtype=jnp.bfloat16, eps=LAYER_NORM_EPS):
    """Pure-JAX reference mirroring the kernel numerics (bf16 matmul
    operands, f32 accumulation, f32 GELU / LayerNorm)."""
    B, S, H = x.shape
    C = w2.shape[1]
    xb = x.reshape(-1, H).astype(compute_dtype)
    h = jnp.dot(xb, w1.astype(compute_dtype),
                preferred_element_type=jnp.float32) + b1
    h = 0.5 * h * (1.0 + lax.erf(h * _INV_SQRT2))
    mean = jnp.mean(h, axis=-1, keepdims=True)
    var = jnp.mean((h - mean) ** 2, axis=-1, keepdims=True)
    h = (h - mean) * lax.rsqrt(var + eps) * gamma + beta
    h = h.astype(compute_dtype)
    logits = jnp.dot(h, w2.astype(compute_dtype),
                     preferred_element_type=jnp.float32) + b_dec
    return logits.astype(x.dtype).reshape(B, S, C)


if __name__ == "__main__":
    # Small config consistent with the module: hidden_size=32, codebook_size=64
    B, S, H, C = 2, 8, 32, 64

    key = jax.random.PRNGKey(0)
    k_x, k_w1, k_b1, k_g, k_bt, k_w2, k_bd = jax.random.split(key, 7)

    x = jax.random.normal(k_x, (B, S, H), dtype=jnp.float32)

    # Deterministic synthetic parameters (shapes from __init__).
    w1 = jax.random.normal(k_w1, (H, H), dtype=jnp.float32) * 0.02    # dense.weight.T
    b1 = jax.random.normal(k_b1, (H,), dtype=jnp.float32) * 0.02      # dense.bias
    gamma = 1.0 + 0.1 * jax.random.normal(k_g, (H,), dtype=jnp.float32)  # LN.weight
    beta = 0.02 * jax.random.normal(k_bt, (H,), dtype=jnp.float32)       # LN.bias
    w2 = jax.random.normal(k_w2, (H, C), dtype=jnp.float32) * 0.02    # decoder.weight.T
    b_dec = 0.02 * jax.random.normal(k_bd, (C,), dtype=jnp.float32)   # shared bias

    run = jax.jit(functools.partial(mim_head))
    out = jax.block_until_ready(run(x, w1, b1, gamma, beta, w2, b_dec))

    ref = mim_head_reference(x, w1, b1, gamma, beta, w2, b_dec)
    assert out.shape == (B, S, C), out.shape
    max_err = float(jnp.max(jnp.abs(out - ref)))
    assert max_err < 5e-3, max_err

    print("KERNEL_OK")
</pallas_src>

<mosaic_0001>
module attributes {stable_mosaic.version = 11 : i64} {
  func.func @_mim_head_kernel(%arg0: i32, %arg1: i32, %arg2: memref<16x32xf32, #tpu.memory_space<vmem>>, %arg3: memref<32x32xbf16, #tpu.memory_space<vmem>>, %arg4: memref<1x32xf32, #tpu.memory_space<vmem>>, %arg5: memref<1x32xf32, #tpu.memory_space<vmem>>, %arg6: memref<1x32xf32, #tpu.memory_space<vmem>>, %arg7: memref<32x128xbf16, #tpu.memory_space<vmem>>, %arg8: memref<1x128xf32, #tpu.memory_space<vmem>>, %arg9: memref<16x128xf32, #tpu.memory_space<vmem>>, %arg10: memref<16x32xbf16, #tpu.memory_space<vmem>>) attributes {dimension_semantics = [#tpu.dimension_semantics<parallel>, #tpu.dimension_semantics<arbitrary>], iteration_bounds = array<i64: 1, 1>, scalar_prefetch = 0 : i64, scratch_operands = 1 : i64, tpu.core_type = #tpu.core_type<tc>, window_params = [{transform_indices = @transform_0, window_bounds = array<i64: 16, 32>}, {pipeline_mode = #tpu.pipeline_mode<synchronous>, transform_indices = @transform_1, window_bounds = array<i64: 32, 32>}, {pipeline_mode = #tpu.pipeline_mode<synchronous>, transform_indices = @transform_2, window_bounds = array<i64: 1, 32>}, {pipeline_mode = #tpu.pipeline_mode<synchronous>, transform_indices = @transform_3, window_bounds = array<i64: 1, 32>}, {pipeline_mode = #tpu.pipeline_mode<synchronous>, transform_indices = @transform_4, window_bounds = array<i64: 1, 32>}, {transform_indices = @transform_5, window_bounds = array<i64: 32, 128>}, {transform_indices = @transform_6, window_bounds = array<i64: 1, 128>}, {transform_indices = @transform_7, window_bounds = array<i64: 16, 128>}]} {
    %c0_i32 = arith.constant 0 : i32
    %0 = arith.cmpi eq, %arg1, %c0_i32 : i32
    %1 = arith.extui %0 : i1 to i32
    %c0_i32_0 = arith.constant 0 : i32
    %2 = arith.cmpi ne, %1, %c0_i32_0 : i32
    scf.if %2 {
      %c0_8 = arith.constant 0 : index
      %c0_9 = arith.constant 0 : index
      %10 = vector.load %arg2[%c0_8, %c0_9] : memref<16x32xf32, #tpu.memory_space<vmem>>, vector<16x32xf32>
      %11 = arith.truncf %10 : vector<16x32xf32> to vector<16x32xbf16>
      %c0_10 = arith.constant 0 : index
      %c0_11 = arith.constant 0 : index
      %12 = vector.load %arg3[%c0_10, %c0_11] : memref<32x32xbf16, #tpu.memory_space<vmem>>, vector<32x32xbf16>
      %cst_12 = arith.constant dense<0.000000e+00> : vector<16x32xf32>
      %13 = tpu.matmul %11, %12, %cst_12 {dimension_numbers = #tpu.dot_dimension_numbers<[1], [0], [0], [1], [0, 0, 1, 1], [], []>} : vector<16x32xbf16>, vector<32x32xbf16>, vector<16x32xf32> -> vector<16x32xf32>
      %c0_13 = arith.constant 0 : index
      %c0_14 = arith.constant 0 : index
      %14 = vector.load %arg4[%c0_13, %c0_14] : memref<1x32xf32, #tpu.memory_space<vmem>>, vector<1x32xf32>
      %15 = vector.broadcast %14 : vector<1x32xf32> to vector<16x32xf32>
      %16 = arith.addf %13, %15 : vector<16x32xf32>
      %cst_15 = arith.constant 5.000000e-01 : f32
      %17 = vector.broadcast %cst_15 : f32 to vector<16x32xf32>
      %18 = arith.mulf %17, %16 : vector<16x32xf32>
      %cst_16 = arith.constant 0.707106769 : f32
      %19 = vector.broadcast %cst_16 : f32 to vector<16x32xf32>
      %20 = arith.mulf %16, %19 : vector<16x32xf32>
      %21 = math.erf %20 : vector<16x32xf32>
      %cst_17 = arith.constant 1.000000e+00 : f32
      %22 = vector.broadcast %cst_17 : f32 to vector<16x32xf32>
      %23 = arith.addf %22, %21 : vector<16x32xf32>
      %24 = arith.mulf %18, %23 : vector<16x32xf32>
      %cst_18 = arith.constant dense<0.000000e+00> : vector<16xf32>
      %25 = vector.multi_reduction <add>, %24, %cst_18 [1] : vector<16x32xf32> to vector<16xf32>
      %26 = vector.shape_cast %25 : vector<16xf32> to vector<16x1xf32>
      %cst_19 = arith.constant 3.200000e+01 : f32
      %27 = vector.broadcast %cst_19 : f32 to vector<16x1xf32>
      %28 = arith.divf %26, %27 : vector<16x1xf32>
      %29 = vector.broadcast %28 : vector<16x1xf32> to vector<16x32xf32>
      %30 = arith.subf %24, %29 : vector<16x32xf32>
      %31 = arith.mulf %30, %30 : vector<16x32xf32>
      %cst_20 = arith.constant dense<0.000000e+00> : vector<16xf32>
      %32 = vector.multi_reduction <add>, %31, %cst_20 [1] : vector<16x32xf32> to vector<16xf32>
      %33 = vector.shape_cast %32 : vector<16xf32> to vector<16x1xf32>
      %cst_21 = arith.constant 3.200000e+01 : f32
      %34 = vector.broadcast %cst_21 : f32 to vector<16x1xf32>
      %35 = arith.divf %33, %34 : vector<16x1xf32>
      %36 = vector.broadcast %28 : vector<16x1xf32> to vector<16x32xf32>
      %37 = arith.subf %24, %36 : vector<16x32xf32>
      %cst_22 = arith.constant 9.99999974E-6 : f32
      %38 = vector.broadcast %cst_22 : f32 to vector<16x1xf32>
      %39 = arith.addf %35, %38 : vector<16x1xf32>
      %40 = math.rsqrt %39 : vector<16x1xf32>
      %41 = vector.broadcast %40 : vector<16x1xf32> to vector<16x32xf32>
      %42 = arith.mulf %37, %41 : vector<16x32xf32>
      %c0_23 = arith.constant 0 : index
      %c0_24 = arith.constant 0 : index
      %43 = vector.load %arg5[%c0_23, %c0_24] : memref<1x32xf32, #tpu.memory_space<vmem>>, vector<1x32xf32>
      %44 = vector.broadcast %43 : vector<1x32xf32> to vector<16x32xf32>
      %45 = arith.mulf %42, %44 : vector<16x32xf32>
      %c0_25 = arith.constant 0 : index
      %c0_26 = arith.constant 0 : index
      %46 = vector.load %arg6[%c0_25, %c0_26] : memref<1x32xf32, #tpu.memory_space<vmem>>, vector<1x32xf32>
      %47 = vector.broadcast %46 : vector<1x32xf32> to vector<16x32xf32>
      %48 = arith.addf %45, %47 : vector<16x32xf32>
      %49 = arith.truncf %48 : vector<16x32xf32> to vector<16x32xbf16>
      %c0_27 = arith.constant 0 : index
      %c0_28 = arith.constant 0 : index
      %50 = vector.load %arg10[%c0_27, %c0_28] : memref<16x32xbf16, #tpu.memory_space<vmem>>, vector<16x32xbf16>
      tpu.vector_store %arg10[%c0_27, %c0_28], %49 {strides = array<i32>} : memref<16x32xbf16, #tpu.memory_space<vmem>>, vector<16x32xbf16>,
    } else {
    }
    %c0 = arith.constant 0 : index
    %c0_1 = arith.constant 0 : index
    %3 = vector.load %arg10[%c0, %c0_1] : memref<16x32xbf16, #tpu.memory_space<vmem>>, vector<16x32xbf16>
    %c0_2 = arith.constant 0 : index
    %c0_3 = arith.constant 0 : index
    %4 = vector.load %arg7[%c0_2, %c0_3] : memref<32x128xbf16, #tpu.memory_space<vmem>>, vector<32x128xbf16>
    %cst = arith.constant dense<0.000000e+00> : vector<16x128xf32>
    %5 = tpu.matmul %3, %4, %cst {dimension_numbers = #tpu.dot_dimension_numbers<[1], [0], [0], [1], [0, 0, 1, 1], [], []>} : vector<16x32xbf16>, vector<32x128xbf16>, vector<16x128xf32> -> vector<16x128xf32>
    %c0_4 = arith.constant 0 : index
    %c0_5 = arith.constant 0 : index
    %6 = vector.load %arg8[%c0_4, %c0_5] : memref<1x128xf32, #tpu.memory_space<vmem>>, vector<1x128xf32>
    %7 = vector.broadcast %6 : vector<1x128xf32> to vector<16x128xf32>
    %8 = arith.addf %5, %7 : vector<16x128xf32>
    %c0_6 = arith.constant 0 : index
    %c0_7 = arith.constant 0 : index
    %9 = vector.load %arg9[%c0_6, %c0_7] : memref<16x128xf32, #tpu.memory_space<vmem>>, vector<16x128xf32>
    tpu.vector_store %arg9[%c0_6, %c0_7], %8 {strides = array<i32>} : memref<16x128xf32, #tpu.memory_space<vmem>>, vector<16x128xf32>,
    return
  }
  func.func @transform_0(%arg0: i32, %arg1: i32) -> (i32, i32) {
    %c0_i32 = arith.constant 0 : i32
    %c0_i32_0 = arith.constant 0 : i32
    return %arg0, %c0_i32 : i32, i32
  }
  func.func @transform_1(%arg0: i32, %arg1: i32) -> (i32, i32) {
    %c0_i32 = arith.constant 0 : i32
    %c0_i32_0 = arith.constant 0 : i32
    %c0_i32_1 = arith.constant 0 : i32
    return %c0_i32, %c0_i32_0 : i32, i32
  }
  func.func @transform_2(%arg0: i32, %arg1: i32) -> (i32, i32) {
    %c0_i32 = arith.constant 0 : i32
    %c0_i32_0 = arith.constant 0 : i32
    %c0_i32_1 = arith.constant 0 : i32
    return %c0_i32, %c0_i32_0 : i32, i32
  }
  func.func @transform_3(%arg0: i32, %arg1: i32) -> (i32, i32) {
    %c0_i32 = arith.constant 0 : i32
    %c0_i32_0 = arith.constant 0 : i32
    %c0_i32_1 = arith.constant 0 : i32
    return %c0_i32, %c0_i32_0 : i32, i32
  }
  func.func @transform_4(%arg0: i32, %arg1: i32) -> (i32, i32) {
    %c0_i32 = arith.constant 0 : i32
    %c0_i32_0 = arith.constant 0 : i32
    %c0_i32_1 = arith.constant 0 : i32
    return %c0_i32, %c0_i32_0 : i32, i32
  }
  func.func @transform_5(%arg0: i32, %arg1: i32) -> (i32, i32) {
    %c0_i32 = arith.constant 0 : i32
    %c0_i32_0 = arith.constant 0 : i32
    return %c0_i32, %arg1 : i32, i32
  }
  func.func @transform_6(%arg0: i32, %arg1: i32) -> (i32, i32) {
    %c0_i32 = arith.constant 0 : i32
    %c0_i32_0 = arith.constant 0 : i32
    return %c0_i32, %arg1 : i32, i32
  }
  func.func @transform_7(%arg0: i32, %arg1: i32) -> (i32, i32) {
    %c0_i32 = arith.constant 0 : i32
    return %arg0, %arg1 : i32, i32
  }
}

</mosaic_0001>

<llo_original>
// kernel: mim_head.1
$region0: #{mim_head.1}
  #allocation0 [shape = 'u32[]', space=smem, size = 0x4, offset = 0x4, fixed_abs, tag = 'smem constant byte address 0x4 - core index']
  #allocation1 [shape = 'u32[72,128]{1,0:T(1,128)}', space=vmem, size = 0x9000, scoped, tag = 'internal scratch']
  #allocation2 [shape = 'bf16[16,32]{1,0:T(8,128)(2,1)}', space=vmem, size = 0x1000, scoped, tag = 'scratch operand']
  %s0 = inlined_call_operand.vmem [shape: f32[16,32], index: 0, kind: input, shape index: {}]
  %s1 = inlined_call_operand.vmem [shape: bf16[32,32], index: 1, kind: input, shape index: {}]
  %s2 = inlined_call_operand.vmem [shape: f32[1,32], index: 2, kind: input, shape index: {}]
  %s3 = inlined_call_operand.vmem [shape: f32[1,32], index: 3, kind: input, shape index: {}]
  %s4 = inlined_call_operand.vmem [shape: f32[1,32], index: 4, kind: input, shape index: {}]
  %s5 = inlined_call_operand.vmem [shape: bf16[32,128], index: 5, kind: input, shape index: {}]
  %s6 = inlined_call_operand.vmem [shape: f32[1,128], index: 6, kind: input, shape index: {}]
  %s7 = inlined_call_operand.vmem [shape: f32[16,128], index: 7, kind: output, shape index: {}]
  %s8 = sld [smem:[#allocation0]]
  $region42: #{mim_head.1} parent=0
    _
  %s10 = ssub.s32 1, %s8
  %s11 = scalar_select 0, %s10, %s8
  // Predicated region
  $region2: #{mim_head.1} parent=0 // pred_check
    _
  $region3: #{mim_head.1} parent=0 // pred_check_branch
    %13 = sbr.rel (0) target = $region5
  $region4: #{mim_head.1} parent=0 // pred_region
    _
  $region5: #{mim_head.1} parent=0 // pred_fallthru
    _
  // Predicated region
  $region6: #{mim_head.1} parent=0 // pred_check
    _
  $region7: #{mim_head.1} parent=0 // pred_check_branch
    %15 = sbr.rel (0) target = $region9
  $region8: #{mim_head.1} parent=0 // pred_region
    _
  $region9: #{mim_head.1} parent=0 // pred_fallthru
    _
  // Predicated region
  $region10: #{mim_head.1} parent=0 // pred_check
    _
  $region11: #{mim_head.1} parent=0 // pred_check_branch
    %17 = sbr.rel (0) target = $region13
  $region12: #{mim_head.1} parent=0 // pred_region
    _
  $region13: #{mim_head.1} parent=0 // pred_fallthru
    _
  // Predicated region
  $region14: #{mim_head.1} parent=0 // pred_check
    _
  $region15: #{mim_head.1} parent=0 // pred_check_branch
    %19 = sbr.rel (0) target = $region17
  $region16: #{mim_head.1} parent=0 // pred_region
    _
  $region17: #{mim_head.1} parent=0 // pred_fallthru
    _
  // Predicated region
  $region18: #{mim_head.1} parent=0 // pred_check
    _
  $region19: #{mim_head.1} parent=0 // pred_check_branch
    %21 = sbr.rel (0) target = $region21
  $region20: #{mim_head.1} parent=0 // pred_region
    _
  $region21: #{mim_head.1} parent=0 // pred_fallthru
    _
  // Predicated region
  $region22: #{mim_head.1} parent=0 // pred_check
    _
  $region23: #{mim_head.1} parent=0 // pred_check_branch
    %23 = sbr.rel (0) target = $region25
  $region24: #{mim_head.1} parent=0 // pred_region
    _
  $region25: #{mim_head.1} parent=0 // pred_fallthru
    _
  // Predicated region
  $region26: #{mim_head.1} parent=0 // pred_check
    _
  $region27: #{mim_head.1} parent=0 // pred_check_branch
    %25 = sbr.rel (0) target = $region29
  $region28: #{mim_head.1} parent=0 // pred_region
    _
  $region29: #{mim_head.1} parent=0 // pred_fallthru
    _
  %p27 = scmp.eq.s32.totalorder 0, 0
  // Predicated region
  $region30: #{mim_head.1} parent=0 // pred_check
    %p28 = pneg %p27
  $region31: #{mim_head.1} parent=0 // pred_check_branch
    %30 = sbr.rel (%p28) target = $region33
  $region32: #{mim_head.1} parent=0 // pred_region
    %v31 = vld [vmem:[%s0] sm:$0xff]
    %v32 = vld [vmem:[%s0 + $0x8] sm:$0xff]
    %v33 = vpack.c.bf16 %v32, %v31
    %v34 = vld [vmem:[%s1] sm:$0xf]
    %v35 = vld [vmem:[%s1 + $0x4] sm:$0xf]
    %v36 = vld [vmem:[%s1 + $0x8] sm:$0xf]
    %v37 = vld [vmem:[%s1 + $0xc] sm:$0xf]
    %v38 = vld [vmem:[%s2] sm:$0x1]
    %v40 = vperm.slane %v38, 0
    %v46 = vunpack.c.l.b16 %v34
    %v47 = vunpack.c.l.b16 %v35
    %v48 = vunpack.c.l.b16 %v36
    %v49 = vunpack.c.l.b16 %v37
    %v50 = vpack.c.b16 %v47, %v46
    %v51 = vpack.c.b16 %v49, %v48
    %vm54 = vcmask 261120
    %v56 = vsel %vm54, %v33, 0
    %58 = vmatpush.bf16.msra.mxu0 0
    %59 = vmatpush.bf16.msra.mxu0 0
    %60 = vmatpush.bf16.msra.mxu0 0
    %61 = vmatpush.bf16.msra.mxu0 0
    %62 = vmatpush.bf16.msra.mxu0 0
    %63 = vmatpush.bf16.msra.mxu0 0
    %64 = vmatpush.bf16.msra.mxu0 %v51
    %65 = vmatpush.bf16.msra.mxu0 %v50
    %66 = vmatmul.bf16.gmra.mxu0 %v56
    %v67 = vpop.f32.mrf.mxu0
    %v68 = vadd.f32 %v40, %v67
    %v69 = vpop.f32.mrf.mxu0
    %v70 = vadd.f32 %v40, %v69
    %71 = vdwg.mxu0
    %v72 = vmul.f32 %v68, 0.5
    %v73 = vmul.f32 %v70, 0.5
    %v74 = vmul.f32 %v68, 0.70710677
    %v75 = vmul.f32 %v70, 0.70710677
    %v76 = vmul.f32 %v74, %v74
    %v77 = vmin.f32 16.0, %v76
    %v78 = vmul.f32 %v77, 2.1237322e-06
    %v79 = vadd.f32 %v78, 0.00028619796
    %v80 = vmul.f32 %v77, %v79
    %v81 = vadd.f32 %v80, 0.0036580483
    %v82 = vmul.f32 %v77, %v81
    %v83 = vadd.f32 %v82, 0.05243302
    %v84 = vmul.f32 %v77, %v83
    %v85 = vadd.f32 %v84, 0.18741608
    %v86 = vmul.f32 %v77, %v85
    %v87 = vadd.f32 %v86, 1.1283791
    %v88 = vmul.f32 %v74, %v87
    %v89 = vmul.f32 %v77, 3.8918573e-05
    %v90 = vadd.f32 %v89, 0.001143296
    %v91 = vmul.f32 %v77, %v90
    %v92 = vadd.f32 %v91, 0.014752088
    %v93 = vmul.f32 %v77, %v92
    %v94 = vadd.f32 %v93, 0.112945676
    %v95 = vmul.f32 %v77, %v94
    %v96 = vadd.f32 %v95, 0.4994258
    %v97 = vmul.f32 %v77, %v96
    %v98 = vadd.f32 %v97, 1.0
    %v99 = vrcp.pop %v98
    %v100 = vmul.f32 %v98, %v99
    %v101 = vsub.f32 1.0, %v100
    %v102 = vmul.f32 %v99, %v101
    %v103 = vadd.f32 %v99, %v102
    %vm104 = vweird.f32 %v98
    %vm105 = vweird.f32 %v99
    %vm106 = vmor %vm104, %vm105
    %v107 = vsel %vm106, %v99, %v103
    %v108 = vand.u32 2147483647, %v98
    %vm109 = vcmp.eq.f32.partialorder %v108, 8.507059e+37
    %v110 = vand.u32 %v98, 2147483648
    %v111 = vor.u32 1.1754944e-38, %v110
    %v112 = vsel %vm109, %v111, %v107
    %v113 = vmul.f32 %v88, %v112
    %v114 = vmin.f32 %v113, 1.0
    %v115 = vmax.f32 %v114, -1.0
    %v116 = vmul.f32 %v75, %v75
    %v117 = vmin.f32 16.0, %v116
    %v118 = vmul.f32 %v117, 2.1237322e-06
    %v119 = vadd.f32 %v118, 0.00028619796
    %v120 = vmul.f32 %v117, %v119
    %v121 = vadd.f32 %v120, 0.0036580483
    %v122 = vmul.f32 %v117, %v121
    %v123 = vadd.f32 %v122, 0.05243302
    %v124 = vmul.f32 %v117, %v123
    %v125 = vadd.f32 %v124, 0.18741608
    %v126 = vmul.f32 %v117, %v125
    %v127 = vadd.f32 %v126, 1.1283791
    %v128 = vmul.f32 %v75, %v127
    %v129 = vmul.f32 %v117, 3.8918573e-05
    %v130 = vadd.f32 %v129, 0.001143296
    %v131 = vmul.f32 %v117, %v130
    %v132 = vadd.f32 %v131, 0.014752088
    %v133 = vmul.f32 %v117, %v132
    %v134 = vadd.f32 %v133, 0.112945676
    %v135 = vmul.f32 %v117, %v134
    %v136 = vadd.f32 %v135, 0.4994258
    %v137 = vmul.f32 %v117, %v136
    %v138 = vadd.f32 %v137, 1.0
    %v139 = vrcp.pop %v138
    %v140 = vmul.f32 %v138, %v139
    %v141 = vsub.f32 1.0, %v140
    %v142 = vmul.f32 %v139, %v141
    %v143 = vadd.f32 %v139, %v142
    %vm144 = vweird.f32 %v138
    %vm145 = vweird.f32 %v139
    %vm146 = vmor %vm144, %vm145
    %v147 = vsel %vm146, %v139, %v143
    %v148 = vand.u32 2147483647, %v138
    %vm149 = vcmp.eq.f32.partialorder %v148, 8.507059e+37
    %v150 = vand.u32 %v138, 2147483648
    %v151 = vor.u32 1.1754944e-38, %v150
    %v152 = vsel %vm149, %v151, %v147
    %v153 = vmul.f32 %v128, %v152
    %v154 = vmin.f32 %v153, 1.0
    %v155 = vmax.f32 %v154, -1.0
    %v156 = vadd.f32 %v115, 1.0
    %v157 = vadd.f32 %v155, 1.0
    %v158 = vmul.f32 %v72, %v156
    %v159 = vmul.f32 %v73, %v157
    %v160 = vsel %vm54, %v158, 0.0
    %161 = vadd.xlane.f32.xlu0 %v160
    %v162 = vpop.xlane.xlu0 %161
    %v163 = vsel %vm54, %v159, 0.0
    %164 = vadd.xlane.f32.xlu0 %v163
    %v165 = vpop.xlane.xlu0 %164
    %v166 = vrcp.pop 32.0
    %v167 = vmul.f32 32.0, %v166
    %v168 = vsub.f32 1.0, %v167
    %v169 = vmul.f32 %v166, %v168
    %v170 = vadd.f32 %v166, %v169
    %vm171 = vweird.f32 %v166
    %v172 = vsel %vm171, %v166, %v170
    %v173 = vmul.f32 %v162, %v172
    %v174 = vmul.f32 %v165, %v172
    %v175 = vsub.f32 %v158, %v173
    %v176 = vsub.f32 %v159, %v174
    %v177 = vmul.f32 %v175, %v175
    %v178 = vmul.f32 %v176, %v176
    %v179 = vsel %vm54, %v177, 0.0
    %180 = vadd.xlane.f32.xlu0 %v179
    %v181 = vpop.xlane.xlu0 %180
    %v182 = vsel %vm54, %v178, 0.0
    %183 = vadd.xlane.f32.xlu0 %v182
    %v184 = vpop.xlane.xlu0 %183
    %v185 = vmul.f32 %v181, %v172
    %v186 = vmul.f32 %v184, %v172
    %v187 = vadd.f32 %v185, 1e-05
    %v188 = vadd.f32 %v186, 1e-05
    %v189 = vrsqrt.pop %v187
    %v190 = vmul.f32 %v189, %v187
    %v191 = vmul.f32 %v190, %v189
    %v192 = vmul.f32 0.5, %v191
    %v193 = vsub.f32 1.5, %v192
    %v194 = vmul.f32 %v189, %v193
    %vm195 = vweird.f32 %v187
    %vm196 = vweird.f32 %v189
    %vm197 = vmor %vm195, %vm196
    %v198 = vsel %vm197, %v189, %v194
    %v199 = vrsqrt.pop %v188
    %v200 = vmul.f32 %v199, %v188
    %v201 = vmul.f32 %v200, %v199
    %v202 = vmul.f32 0.5, %v201
    %v203 = vsub.f32 1.5, %v202
    %v204 = vmul.f32 %v199, %v203
    %vm205 = vweird.f32 %v188
    %vm206 = vweird.f32 %v199
    %vm207 = vmor %vm205, %vm206
    %v208 = vsel %vm207, %v199, %v204
    %v209 = vmul.f32 %v175, %v198
    %v210 = vmul.f32 %v176, %v208
    %v211 = vld [vmem:[%s3] sm:$0x1]
    %v213 = vperm.slane %v211, 0
    %v215 = vmul.f32 %v209, %v213
    %v216 = vmul.f32 %v210, %v213
    %v217 = vld [vmem:[%s4] sm:$0x1]
    %v219 = vperm.slane %v217, 0
    %v221 = vadd.f32 %v215, %v219
    %v222 = vadd.f32 %v216, %v219
    %v223 = vpack.c.bf16 %v221, %v221
    %v224 = vpack.c.bf16 %v222, %v222
    %vm225 = vcmask 257024
    %226 = vst.msk [vmem:[#allocation2] sm:$0xf] %vm225, %v223
    %227 = vst.msk [vmem:[#allocation2 + $0x4] sm:$0xf] %vm225, %v224
  $region33: #{mim_head.1} parent=0 // pred_fallthru
    _
  %v228 = vld [vmem:[#allocation2] sm:$0xf]
  %v229 = vld [vmem:[#allocation2 + $0x4] sm:$0xf]
  %v230 = vld [vmem:[%s5] sm:$0xf]
  %v231 = vld [vmem:[%s5 + $0x4] sm:$0xf]
  %v232 = vld [vmem:[%s5 + $0x8] sm:$0xf]
  %v233 = vld [vmem:[%s5 + $0xc] sm:$0xf]
  %v234 = vld [vmem:[%s6] sm:$0x1]
  %v236 = vperm.slane %v234, 0
  %v240 = vunpack.c.l.b16 %v228
  %v241 = vunpack.c.l.b16 %v229
  %v242 = vpack.c.b16 %v241, %v240
  %v247 = vunpack.c.l.b16 %v230
  %v248 = vunpack.c.l.b16 %v231
  %v249 = vunpack.c.l.b16 %v232
  %v250 = vunpack.c.l.b16 %v233
  %v251 = vpack.c.b16 %v248, %v247
  %v252 = vpack.c.b16 %v250, %v249
  %vm255 = vcmask 261120
  %v257 = vsel %vm255, %v242, 0
  %259 = vmatpush.bf16.msra.mxu0 0
  %260 = vmatpush.bf16.msra.mxu0 0
  %261 = vmatpush.bf16.msra.mxu0 0
  %262 = vmatpush.bf16.msra.mxu0 0
  %263 = vmatpush.bf16.msra.mxu0 0
  %264 = vmatpush.bf16.msra.mxu0 0
  %265 = vmatpush.bf16.msra.mxu0 %v252
  %266 = vmatpush.bf16.msra.mxu0 %v251
  %267 = vmatmul.bf16.gmra.mxu0 %v257
  %v268 = vpop.f32.mrf.mxu0
  %v269 = vadd.f32 %v236, %v268
  %v270 = vpop.f32.mrf.mxu0
  %v271 = vadd.f32 %v236, %v270
  %272 = vdwg.mxu0
  %273 = vst [vmem:[%s7] sm:$0xff] %v269
  %274 = vst [vmem:[%s7 + $0x8] sm:$0xff] %v271
  // Predicated region
  $region34: #{mim_head.1} parent=0 // pred_check
    _
  $region35: #{mim_head.1} parent=0 // pred_check_branch
    %276 = sbr.rel (0) target = $region37
  $region36: #{mim_head.1} parent=0 // pred_region
    _
  $region37: #{mim_head.1} parent=0 // pred_fallthru
    _
  // Predicated region
  $region38: #{mim_head.1} parent=0 // pred_check
    _
  $region39: #{mim_head.1} parent=0 // pred_check_branch
    %278 = sbr.rel (0) target = $region41
  $region40: #{mim_head.1} parent=0 // pred_region
    _
  $region41: #{mim_head.1} parent=0 // pred_fallthru
    _

</llo_original>
